<compile_context>
chip_gen: v7x
topology: tpu7x:2x2x1
jax: 0.10.0
libtpu: 0.0.40
codegen_flags: <defaults>
</compile_context>

<pallas_src>
import functools

import jax
import jax.numpy as jnp
from jax.experimental import pallas as pl
from jax.experimental.pallas import tpu as pltpu

LANE = 128
SUBLANE = 8


def mlp_kernel(params_ref, x_ref, o_ref, *, n_hidden):
    """Elementwise forward: y = b2 + sum_h w2[h] * relu(w1[h] * x + b1[h]).

    params_ref : SMEM (3*H + 1,) f32 laid out [w1(H) | b1(H) | w2(H) | b2]
    x_ref/o_ref: VMEM (R, C) tiles, batch laid out sublane+lane dense.
    Pure VPU work (scalar broadcasts from SMEM); no MXU, no XLU reduction.
    """
    x = x_ref[...]
    acc = jnp.zeros_like(x)
    for h in range(n_hidden):                      # trace-time unroll, H is tiny
        w1 = params_ref[h]
        b1 = params_ref[n_hidden + h]
        w2 = params_ref[2 * n_hidden + h]
        acc = acc + w2 * jnp.maximum(w1 * x + b1, 0.0)
    o_ref[...] = (acc + params_ref[3 * n_hidden]).astype(o_ref.dtype)


def _round_up(n, m):
    return ((n + m - 1) // m) * m


def net_forward(x, w1, b1, w2, b2):
    """x: (N, F) f32 with F == 1; w1: (F, H); b1: (1, H); w2: (H, O) with O == 1; b2: (1, O)."""
    N, F = x.shape
    H = w1.shape[1]
    O = w2.shape[1]
    assert F == 1 and O == 1, "VPU formulation specialized to n_features == n_output == 1"

    # Single packed parameter operand, resident in SMEM across all grid steps.
    params = jnp.concatenate(
        [w1.reshape(H), b1.reshape(H), w2.reshape(H), b2.reshape(1)]
    ).astype(jnp.float32)
    param_spec = pl.BlockSpec(memory_space=pltpu.MemorySpace.SMEM)

    kernel = functools.partial(mlp_kernel, n_hidden=H)
    xf = x.reshape(N).astype(jnp.float32)          # free metadata reshape (F == 1)

    SMALL_CUTOFF = 8192
    if N <= SMALL_CUTOFF:
        # Launch/DMA-overhead bound regime: one grid step, full-array blocks,
        # zero padding, zero slicing.
        x2d = xf.reshape(1, N)
        y2d = pl.pallas_call(
            kernel,
            out_shape=jax.ShapeDtypeStruct((1, N), jnp.float32),
            grid=(1,),
            in_specs=[param_spec, pl.BlockSpec((1, N), lambda i: (0, 0))],
            out_specs=pl.BlockSpec((1, N), lambda i: (0, 0)),
            compiler_params=pltpu.CompilerParams(dimension_semantics=("arbitrary",)),
        )(params, x2d)
        return y2d.reshape(N, O)

    # Bandwidth-bound regime: sublane+lane dense slab, large blocks, ragged last block.
    C = 8 * LANE                                   # 1024 lanes per row (8 f32 vregs wide)
    n_pad = _round_up(N, C)                        # pad only to the next 1024, not to a tile multiple
    if n_pad != N:
        xf = jnp.pad(xf, (0, n_pad - N))
    R = n_pad // C

    # ~2 MiB f32 blocks, but keep >= 2 grid steps so "parallel" can shard the
    # work across both TensorCores on v7x even for medium batches.
    TR = min(512, max(SUBLANE, _round_up(pl.cdiv(R, 2), SUBLANE)))
    grid = (pl.cdiv(R, TR),)

    y2d = pl.pallas_call(
        kernel,
        out_shape=jax.ShapeDtypeStruct((R, C), jnp.float32),
        grid=grid,
        in_specs=[param_spec, pl.BlockSpec((TR, C), lambda i: (i, 0))],
        out_specs=pl.BlockSpec((TR, C), lambda i: (i, 0)),
        compiler_params=pltpu.CompilerParams(dimension_semantics=("parallel",)),
    )(params, xf.reshape(R, C))

    y = y2d.reshape(n_pad)
    if n_pad != N:
        y = y[:N]
    return y.reshape(N, O)


def init_params(key, n_features, n_hidden, n_output):
    """Deterministic init mimicking torch.nn.Linear (uniform +/- 1/sqrt(fan_in))."""
    k1, k2, k3, k4 = jax.random.split(key, 4)
    bound1 = 1.0 / jnp.sqrt(jnp.float32(n_features))
    bound2 = 1.0 / jnp.sqrt(jnp.float32(n_hidden))
    # stored as (in, out) == torch weight transposed
    w1 = jax.random.uniform(k1, (n_features, n_hidden), jnp.float32, -bound1, bound1)
    b1 = jax.random.uniform(k2, (1, n_hidden), jnp.float32, -bound1, bound1)
    w2 = jax.random.uniform(k3, (n_hidden, n_output), jnp.float32, -bound2, bound2)
    b2 = jax.random.uniform(k4, (1, n_output), jnp.float32, -bound2, bound2)
    return w1, b1, w2, b2


if __name__ == "__main__":
    n_features, n_hidden, n_output = 1, 10, 1
    N = 100

    key = jax.random.PRNGKey(0)
    w1, b1, w2, b2 = init_params(key, n_features, n_hidden, n_output)

    # Same input as the original script: linspace(-1, 1, 100) unsqueezed to (100, 1)
    x = jnp.linspace(-1.0, 1.0, N, dtype=jnp.float32).reshape(N, n_features)

    out = jax.block_until_ready(net_forward(x, w1, b1, w2, b2))
    ref = jnp.maximum(x @ w1 + b1, 0.0) @ w2 + b2
    assert out.shape == (N, n_output)
    assert jnp.allclose(out, ref, atol=1e-5, rtol=1e-5)

    # Also exercise the large-batch path (dense 2-D slab, 2-step parallel grid,
    # ragged last block, minimal padding) at a still-small size.
    N2 = 12345
    x2 = jax.random.normal(jax.random.PRNGKey(1), (N2, n_features), jnp.float32)
    out2 = jax.block_until_ready(net_forward(x2, w1, b1, w2, b2))
    ref2 = jnp.maximum(x2 @ w1 + b1, 0.0) @ w2 + b2
    assert out2.shape == (N2, n_output)
    assert jnp.allclose(out2, ref2, atol=1e-5, rtol=1e-5)

    print("KERNEL_OK")
</pallas_src>

<mosaic_0001>
module attributes {stable_mosaic.version = 11 : i64} {
  func.func @mlp_kernel(%arg0: i32, %arg1: memref<31xf32, #tpu.memory_space<smem>>, %arg2: memref<1x100xf32, #tpu.memory_space<vmem>>, %arg3: memref<1x100xf32, #tpu.memory_space<vmem>>) attributes {dimension_semantics = [#tpu.dimension_semantics<arbitrary>], iteration_bounds = array<i64: 1>, scalar_prefetch = 0 : i64, scratch_operands = 0 : i64, tpu.core_type = #tpu.core_type<tc>, window_params = [{transform_indices = @transform_0, window_bounds = array<i64: 31>}, {pipeline_mode = #tpu.pipeline_mode<synchronous>, transform_indices = @transform_1, window_bounds = array<i64: 1, 100>}, {pipeline_mode = #tpu.pipeline_mode<synchronous>, transform_indices = @transform_2, window_bounds = array<i64: 1, 100>}]} {
    %c0 = arith.constant 0 : index
    %c0_0 = arith.constant 0 : index
    %0 = vector.load %arg2[%c0, %c0_0] : memref<1x100xf32, #tpu.memory_space<vmem>>, vector<1x100xf32>
    %cst = arith.constant 0.000000e+00 : f32
    %1 = vector.broadcast %cst : f32 to vector<1x100xf32>
    %c0_1 = arith.constant 0 : index
    %2 = memref.load %arg1[%c0_1] : memref<31xf32, #tpu.memory_space<smem>>
    %c10 = arith.constant 10 : index
    %3 = memref.load %arg1[%c10] : memref<31xf32, #tpu.memory_space<smem>>
    %c20 = arith.constant 20 : index
    %4 = memref.load %arg1[%c20] : memref<31xf32, #tpu.memory_space<smem>>
    %5 = vector.broadcast %2 : f32 to vector<1x100xf32>
    %6 = arith.mulf %5, %0 : vector<1x100xf32>
    %7 = vector.broadcast %3 : f32 to vector<1x100xf32>
    %8 = arith.addf %6, %7 : vector<1x100xf32>
    %cst_2 = arith.constant 0.000000e+00 : f32
    %9 = vector.broadcast %cst_2 : f32 to vector<1x100xf32>
    %10 = arith.maximumf %8, %9 : vector<1x100xf32>
    %11 = vector.broadcast %4 : f32 to vector<1x100xf32>
    %12 = arith.mulf %11, %10 : vector<1x100xf32>
    %13 = arith.addf %1, %12 : vector<1x100xf32>
    %c1 = arith.constant 1 : index
    %14 = memref.load %arg1[%c1] : memref<31xf32, #tpu.memory_space<smem>>
    %c11 = arith.constant 11 : index
    %15 = memref.load %arg1[%c11] : memref<31xf32, #tpu.memory_space<smem>>
    %c21 = arith.constant 21 : index
    %16 = memref.load %arg1[%c21] : memref<31xf32, #tpu.memory_space<smem>>
    %17 = vector.broadcast %14 : f32 to vector<1x100xf32>
    %18 = arith.mulf %17, %0 : vector<1x100xf32>
    %19 = vector.broadcast %15 : f32 to vector<1x100xf32>
    %20 = arith.addf %18, %19 : vector<1x100xf32>
    %cst_3 = arith.constant 0.000000e+00 : f32
    %21 = vector.broadcast %cst_3 : f32 to vector<1x100xf32>
    %22 = arith.maximumf %20, %21 : vector<1x100xf32>
    %23 = vector.broadcast %16 : f32 to vector<1x100xf32>
    %24 = arith.mulf %23, %22 : vector<1x100xf32>
    %25 = arith.addf %13, %24 : vector<1x100xf32>
    %c2 = arith.constant 2 : index
    %26 = memref.load %arg1[%c2] : memref<31xf32, #tpu.memory_space<smem>>
    %c12 = arith.constant 12 : index
    %27 = memref.load %arg1[%c12] : memref<31xf32, #tpu.memory_space<smem>>
    %c22 = arith.constant 22 : index
    %28 = memref.load %arg1[%c22] : memref<31xf32, #tpu.memory_space<smem>>
    %29 = vector.broadcast %26 : f32 to vector<1x100xf32>
    %30 = arith.mulf %29, %0 : vector<1x100xf32>
    %31 = vector.broadcast %27 : f32 to vector<1x100xf32>
    %32 = arith.addf %30, %31 : vector<1x100xf32>
    %cst_4 = arith.constant 0.000000e+00 : f32
    %33 = vector.broadcast %cst_4 : f32 to vector<1x100xf32>
    %34 = arith.maximumf %32, %33 : vector<1x100xf32>
    %35 = vector.broadcast %28 : f32 to vector<1x100xf32>
    %36 = arith.mulf %35, %34 : vector<1x100xf32>
    %37 = arith.addf %25, %36 : vector<1x100xf32>
    %c3 = arith.constant 3 : index
    %38 = memref.load %arg1[%c3] : memref<31xf32, #tpu.memory_space<smem>>
    %c13 = arith.constant 13 : index
    %39 = memref.load %arg1[%c13] : memref<31xf32, #tpu.memory_space<smem>>
    %c23 = arith.constant 23 : index
    %40 = memref.load %arg1[%c23] : memref<31xf32, #tpu.memory_space<smem>>
    %41 = vector.broadcast %38 : f32 to vector<1x100xf32>
    %42 = arith.mulf %41, %0 : vector<1x100xf32>
    %43 = vector.broadcast %39 : f32 to vector<1x100xf32>
    %44 = arith.addf %42, %43 : vector<1x100xf32>
    %cst_5 = arith.constant 0.000000e+00 : f32
    %45 = vector.broadcast %cst_5 : f32 to vector<1x100xf32>
    %46 = arith.maximumf %44, %45 : vector<1x100xf32>
    %47 = vector.broadcast %40 : f32 to vector<1x100xf32>
    %48 = arith.mulf %47, %46 : vector<1x100xf32>
    %49 = arith.addf %37, %48 : vector<1x100xf32>
    %c4 = arith.constant 4 : index
    %50 = memref.load %arg1[%c4] : memref<31xf32, #tpu.memory_space<smem>>
    %c14 = arith.constant 14 : index
    %51 = memref.load %arg1[%c14] : memref<31xf32, #tpu.memory_space<smem>>
    %c24 = arith.constant 24 : index
    %52 = memref.load %arg1[%c24] : memref<31xf32, #tpu.memory_space<smem>>
    %53 = vector.broadcast %50 : f32 to vector<1x100xf32>
    %54 = arith.mulf %53, %0 : vector<1x100xf32>
    %55 = vector.broadcast %51 : f32 to vector<1x100xf32>
    %56 = arith.addf %54, %55 : vector<1x100xf32>
    %cst_6 = arith.constant 0.000000e+00 : f32
    %57 = vector.broadcast %cst_6 : f32 to vector<1x100xf32>
    %58 = arith.maximumf %56, %57 : vector<1x100xf32>
    %59 = vector.broadcast %52 : f32 to vector<1x100xf32>
    %60 = arith.mulf %59, %58 : vector<1x100xf32>
    %61 = arith.addf %49, %60 : vector<1x100xf32>
    %c5 = arith.constant 5 : index
    %62 = memref.load %arg1[%c5] : memref<31xf32, #tpu.memory_space<smem>>
    %c15 = arith.constant 15 : index
    %63 = memref.load %arg1[%c15] : memref<31xf32, #tpu.memory_space<smem>>
    %c25 = arith.constant 25 : index
    %64 = memref.load %arg1[%c25] : memref<31xf32, #tpu.memory_space<smem>>
    %65 = vector.broadcast %62 : f32 to vector<1x100xf32>
    %66 = arith.mulf %65, %0 : vector<1x100xf32>
    %67 = vector.broadcast %63 : f32 to vector<1x100xf32>
    %68 = arith.addf %66, %67 : vector<1x100xf32>
    %cst_7 = arith.constant 0.000000e+00 : f32
    %69 = vector.broadcast %cst_7 : f32 to vector<1x100xf32>
    %70 = arith.maximumf %68, %69 : vector<1x100xf32>
    %71 = vector.broadcast %64 : f32 to vector<1x100xf32>
    %72 = arith.mulf %71, %70 : vector<1x100xf32>
    %73 = arith.addf %61, %72 : vector<1x100xf32>
    %c6 = arith.constant 6 : index
    %74 = memref.load %arg1[%c6] : memref<31xf32, #tpu.memory_space<smem>>
    %c16 = arith.constant 16 : index
    %75 = memref.load %arg1[%c16] : memref<31xf32, #tpu.memory_space<smem>>
    %c26 = arith.constant 26 : index
    %76 = memref.load %arg1[%c26] : memref<31xf32, #tpu.memory_space<smem>>
    %77 = vector.broadcast %74 : f32 to vector<1x100xf32>
    %78 = arith.mulf %77, %0 : vector<1x100xf32>
    %79 = vector.broadcast %75 : f32 to vector<1x100xf32>
    %80 = arith.addf %78, %79 : vector<1x100xf32>
    %cst_8 = arith.constant 0.000000e+00 : f32
    %81 = vector.broadcast %cst_8 : f32 to vector<1x100xf32>
    %82 = arith.maximumf %80, %81 : vector<1x100xf32>
    %83 = vector.broadcast %76 : f32 to vector<1x100xf32>
    %84 = arith.mulf %83, %82 : vector<1x100xf32>
    %85 = arith.addf %73, %84 : vector<1x100xf32>
    %c7 = arith.constant 7 : index
    %86 = memref.load %arg1[%c7] : memref<31xf32, #tpu.memory_space<smem>>
    %c17 = arith.constant 17 : index
    %87 = memref.load %arg1[%c17] : memref<31xf32, #tpu.memory_space<smem>>
    %c27 = arith.constant 27 : index
    %88 = memref.load %arg1[%c27] : memref<31xf32, #tpu.memory_space<smem>>
    %89 = vector.broadcast %86 : f32 to vector<1x100xf32>
    %90 = arith.mulf %89, %0 : vector<1x100xf32>
    %91 = vector.broadcast %87 : f32 to vector<1x100xf32>
    %92 = arith.addf %90, %91 : vector<1x100xf32>
    %cst_9 = arith.constant 0.000000e+00 : f32
    %93 = vector.broadcast %cst_9 : f32 to vector<1x100xf32>
    %94 = arith.maximumf %92, %93 : vector<1x100xf32>
    %95 = vector.broadcast %88 : f32 to vector<1x100xf32>
    %96 = arith.mulf %95, %94 : vector<1x100xf32>
    %97 = arith.addf %85, %96 : vector<1x100xf32>
    %c8 = arith.constant 8 : index
    %98 = memref.load %arg1[%c8] : memref<31xf32, #tpu.memory_space<smem>>
    %c18 = arith.constant 18 : index
    %99 = memref.load %arg1[%c18] : memref<31xf32, #tpu.memory_space<smem>>
    %c28 = arith.constant 28 : index
    %100 = memref.load %arg1[%c28] : memref<31xf32, #tpu.memory_space<smem>>
    %101 = vector.broadcast %98 : f32 to vector<1x100xf32>
    %102 = arith.mulf %101, %0 : vector<1x100xf32>
    %103 = vector.broadcast %99 : f32 to vector<1x100xf32>
    %104 = arith.addf %102, %103 : vector<1x100xf32>
    %cst_10 = arith.constant 0.000000e+00 : f32
    %105 = vector.broadcast %cst_10 : f32 to vector<1x100xf32>
    %106 = arith.maximumf %104, %105 : vector<1x100xf32>
    %107 = vector.broadcast %100 : f32 to vector<1x100xf32>
    %108 = arith.mulf %107, %106 : vector<1x100xf32>
    %109 = arith.addf %97, %108 : vector<1x100xf32>
    %c9 = arith.constant 9 : index
    %110 = memref.load %arg1[%c9] : memref<31xf32, #tpu.memory_space<smem>>
    %c19 = arith.constant 19 : index
    %111 = memref.load %arg1[%c19] : memref<31xf32, #tpu.memory_space<smem>>
    %c29 = arith.constant 29 : index
    %112 = memref.load %arg1[%c29] : memref<31xf32, #tpu.memory_space<smem>>
    %113 = vector.broadcast %110 : f32 to vector<1x100xf32>
    %114 = arith.mulf %113, %0 : vector<1x100xf32>
    %115 = vector.broadcast %111 : f32 to vector<1x100xf32>
    %116 = arith.addf %114, %115 : vector<1x100xf32>
    %cst_11 = arith.constant 0.000000e+00 : f32
    %117 = vector.broadcast %cst_11 : f32 to vector<1x100xf32>
    %118 = arith.maximumf %116, %117 : vector<1x100xf32>
    %119 = vector.broadcast %112 : f32 to vector<1x100xf32>
    %120 = arith.mulf %119, %118 : vector<1x100xf32>
    %121 = arith.addf %109, %120 : vector<1x100xf32>
    %c30 = arith.constant 30 : index
    %122 = memref.load %arg1[%c30] : memref<31xf32, #tpu.memory_space<smem>>
    %123 = vector.broadcast %122 : f32 to vector<1x100xf32>
    %124 = arith.addf %121, %123 : vector<1x100xf32>
    %c0_12 = arith.constant 0 : index
    %c0_13 = arith.constant 0 : index
    %125 = vector.load %arg3[%c0_12, %c0_13] : memref<1x100xf32, #tpu.memory_space<vmem>>, vector<1x100xf32>
    tpu.vector_store %arg3[%c0_12, %c0_13], %124 {strides = array<i32>} : memref<1x100xf32, #tpu.memory_space<vmem>>, vector<1x100xf32>,
    return
  }
  func.func @transform_0(%arg0: i32) -> i32 {
    %c0_i32 = arith.constant 0 : i32
    %c0_i32_0 = arith.constant 0 : i32
    return %c0_i32 : i32
  }
  func.func @transform_1(%arg0: i32) -> (i32, i32) {
    %c0_i32 = arith.constant 0 : i32
    %c0_i32_0 = arith.constant 0 : i32
    %c0_i32_1 = arith.constant 0 : i32
    return %c0_i32, %c0_i32_0 : i32, i32
  }
  func.func @transform_2(%arg0: i32) -> (i32, i32) {
    %c0_i32 = arith.constant 0 : i32
    %c0_i32_0 = arith.constant 0 : i32
    %c0_i32_1 = arith.constant 0 : i32
    return %c0_i32, %c0_i32_0 : i32, i32
  }
}

</mosaic_0001>

<llo_original>
// kernel: tpu_custom_call.1
$region0: #{tpu_custom_call.1}
  #allocation0 [shape = 'u32[]', space=smem, size = 0x4, offset = 0x4, fixed_abs, tag = 'smem constant byte address 0x4 - core index']
  #allocation1 [shape = 'u32[144,128]{1,0:T(1,128)}', space=vmem, size = 0x12000, scoped, tag = 'internal scratch']
  %s0 = inlined_call_operand.hbm [shape: f32[31], index: 0, kind: input, shape index: {}]
  %s1 = inlined_call_operand.vmem [shape: f32[1,100], index: 1, kind: input, shape index: {}]
  %s2 = inlined_call_operand.hbm [shape: f32[1,100], index: 2, kind: output, shape index: {}]
  %s3 = sld [smem:[#allocation0]]
  $region22: #{tpu_custom_call.1} parent=0
    _
  %s5 = ssub.s32 1, %s3
  %s6 = scalar_select 0, %s5, %s3
  $region1: #{tpu_custom_call.1} parent=0
    #allocation2 [shape = 'u8[512]{0}', space=smem, size = 0x200, scoped, tag = 'input window, operand 0, single buffered']
    #allocation3 [shape = 's32[1]{0}', space=sflag, size = 0x4, scoped, tag = 'scoped memory for tpu_custom_call.1']
    #allocation4 [shape = 's32[1]{0}', space=sflag, size = 0x4, scoped, tag = 'scoped memory for tpu_custom_call.1']
    #allocation5 [shape = 'u8[512]{0}', space=vmem, size = 0x400, scoped, tag = 'output window, operand 0, single buffered']
    %7 = vsyncpa [#allocation4], 0
    %8 = vsyncpa [#allocation3], 0
    // Predicated region
    $region2: #{tpu_custom_call.1} parent=1 // pred_check
      _
    $region3: #{tpu_custom_call.1} parent=1 // pred_check_branch
      %10 = sbr.rel (0) target = $region5
    $region4: #{tpu_custom_call.1} parent=1 // pred_region
      %s12 = ssub.s32 16, 16
      %13 = vsyncadd [#allocation4], %s12
      %16 = dma.hbm_to_smem %s0, 16, [#allocation2], [#allocation4]
    $region5: #{tpu_custom_call.1} parent=1 // pred_fallthru
      _
    // Predicated region
    $region6: #{tpu_custom_call.1} parent=1 // pred_check
      _
    $region7: #{tpu_custom_call.1} parent=1 // pred_check_branch
      %18 = sbr.rel (0) target = $region9
    $region8: #{tpu_custom_call.1} parent=1 // pred_region
      _
    $region9: #{tpu_custom_call.1} parent=1 // pred_fallthru
      _
    // Predicated region
    $region10: #{tpu_custom_call.1} parent=1 // pred_check
      _
    $region11: #{tpu_custom_call.1} parent=1 // pred_check_branch
      %20 = sbr.rel (0) target = $region13
    $region12: #{tpu_custom_call.1} parent=1 // pred_region
      %21 = dma.done [#allocation4], 16
    $region13: #{tpu_custom_call.1} parent=1 // pred_fallthru
      _
    %22 = sfence
    %v23 = vld [vmem:[%s1] sm:$0x1]
    %s24 = sld [smem:[#allocation2]]
    %s25 = sld [smem:[#allocation2 + $0xa]]
    %s26 = sld [smem:[#allocation2 + $0x14]]
    %v27 = vstv %s24
    %v28 = vmul.f32 %v27, %v23
    %v29 = vstv %s25
    %v30 = vadd.f32 %v28, %v29
    %v31 = vmax.f32 %v30, 0.0
    %v32 = vstv %s26
    %v33 = vmul.f32 %v32, %v31
    %v34 = vadd.f32 %v33, 0.0
    %s35 = sld [smem:[#allocation2 + $0x1]]
    %s36 = sld [smem:[#allocation2 + $0xb]]
    %s37 = sld [smem:[#allocation2 + $0x15]]
    %v38 = vstv %s35
    %v39 = vmul.f32 %v38, %v23
    %v40 = vstv %s36
    %v41 = vadd.f32 %v39, %v40
    %v42 = vmax.f32 %v41, 0.0
    %v43 = vstv %s37
    %v44 = vmul.f32 %v43, %v42
    %v45 = vadd.f32 %v34, %v44
    %s46 = sld [smem:[#allocation2 + $0x2]]
    %s47 = sld [smem:[#allocation2 + $0xc]]
    %s48 = sld [smem:[#allocation2 + $0x16]]
    %v49 = vstv %s46
    %v50 = vmul.f32 %v49, %v23
    %v51 = vstv %s47
    %v52 = vadd.f32 %v50, %v51
    %v53 = vmax.f32 %v52, 0.0
    %v54 = vstv %s48
    %v55 = vmul.f32 %v54, %v53
    %v56 = vadd.f32 %v45, %v55
    %s57 = sld [smem:[#allocation2 + $0x3]]
    %s58 = sld [smem:[#allocation2 + $0xd]]
    %s59 = sld [smem:[#allocation2 + $0x17]]
    %v60 = vstv %s57
    %v61 = vmul.f32 %v60, %v23
    %v62 = vstv %s58
    %v63 = vadd.f32 %v61, %v62
    %v64 = vmax.f32 %v63, 0.0
    %v65 = vstv %s59
    %v66 = vmul.f32 %v65, %v64
    %v67 = vadd.f32 %v56, %v66
    %s68 = sld [smem:[#allocation2 + $0x4]]
    %s69 = sld [smem:[#allocation2 + $0xe]]
    %s70 = sld [smem:[#allocation2 + $0x18]]
    %v71 = vstv %s68
    %v72 = vmul.f32 %v71, %v23
    %v73 = vstv %s69
    %v74 = vadd.f32 %v72, %v73
    %v75 = vmax.f32 %v74, 0.0
    %v76 = vstv %s70
    %v77 = vmul.f32 %v76, %v75
    %v78 = vadd.f32 %v67, %v77
    %s79 = sld [smem:[#allocation2 + $0x5]]
    %s80 = sld [smem:[#allocation2 + $0xf]]
    %s81 = sld [smem:[#allocation2 + $0x19]]
    %v82 = vstv %s79
    %v83 = vmul.f32 %v82, %v23
    %v84 = vstv %s80
    %v85 = vadd.f32 %v83, %v84
    %v86 = vmax.f32 %v85, 0.0
    %v87 = vstv %s81
    %v88 = vmul.f32 %v87, %v86
    %v89 = vadd.f32 %v78, %v88
    %s90 = sld [smem:[#allocation2 + $0x6]]
    %s91 = sld [smem:[#allocation2 + $0x10]]
    %s92 = sld [smem:[#allocation2 + $0x1a]]
    %v93 = vstv %s90
    %v94 = vmul.f32 %v93, %v23
    %v95 = vstv %s91
    %v96 = vadd.f32 %v94, %v95
    %v97 = vmax.f32 %v96, 0.0
    %v98 = vstv %s92
    %v99 = vmul.f32 %v98, %v97
    %v100 = vadd.f32 %v89, %v99
    %s101 = sld [smem:[#allocation2 + $0x7]]
    %s102 = sld [smem:[#allocation2 + $0x11]]
    %s103 = sld [smem:[#allocation2 + $0x1b]]
    %v104 = vstv %s101
    %v105 = vmul.f32 %v104, %v23
    %v106 = vstv %s102
    %v107 = vadd.f32 %v105, %v106
    %v108 = vmax.f32 %v107, 0.0
    %v109 = vstv %s103
    %v110 = vmul.f32 %v109, %v108
    %v111 = vadd.f32 %v100, %v110
    %s112 = sld [smem:[#allocation2 + $0x8]]
    %s113 = sld [smem:[#allocation2 + $0x12]]
    %s114 = sld [smem:[#allocation2 + $0x1c]]
    %v115 = vstv %s112
    %v116 = vmul.f32 %v115, %v23
    %v117 = vstv %s113
    %v118 = vadd.f32 %v116, %v117
    %v119 = vmax.f32 %v118, 0.0
    %v120 = vstv %s114
    %v121 = vmul.f32 %v120, %v119
    %v122 = vadd.f32 %v111, %v121
    %s123 = sld [smem:[#allocation2 + $0x9]]
    %s124 = sld [smem:[#allocation2 + $0x13]]
    %s125 = sld [smem:[#allocation2 + $0x1d]]
    %v126 = vstv %s123
    %v127 = vmul.f32 %v126, %v23
    %v128 = vstv %s124
    %v129 = vadd.f32 %v127, %v128
    %v130 = vmax.f32 %v129, 0.0
    %v131 = vstv %s125
    %v132 = vmul.f32 %v131, %v130
    %v133 = vadd.f32 %v122, %v132
    %s134 = sld [smem:[#allocation2 + $0x1e]]
    %v135 = vstv %s134
    %v136 = vadd.f32 %v133, %v135
    %vm137 = vcmask 811008
    %138 = vst.msk [vmem:[#allocation5] sm:$0x1] %vm137, %v136
    // Predicated region
    $region14: #{tpu_custom_call.1} parent=1 // pred_check
      _
    $region15: #{tpu_custom_call.1} parent=1 // pred_check_branch
      %140 = sbr.rel (0) target = $region17
    $region16: #{tpu_custom_call.1} parent=1 // pred_region
      %s142 = ssub.s32 16, 16
      %143 = vsyncadd [#allocation3], %s142
      %s145 = sshll.u32 [#allocation5], 4
      %s146 = int_to_ptr.vmem [resolvable:$true] %s145
      %148 = dma.vmem_to_hbm [thread:$0]  %s146, 16, %s2, [#allocation3]
    $region17: #{tpu_custom_call.1} parent=1 // pred_fallthru
      _
    // Predicated region
    $region18: #{tpu_custom_call.1} parent=1 // pred_check
      _
    $region19: #{tpu_custom_call.1} parent=1 // pred_check_branch
      %150 = sbr.rel (0) target = $region21
    $region20: #{tpu_custom_call.1} parent=1 // pred_region
      %151 = dma.done [#allocation3], 16
    $region21: #{tpu_custom_call.1} parent=1 // pred_fallthru
      _
    %152 = vsyncpa [#allocation3], 1
    %153 = vsyncpa [#allocation4], 1

</llo_original>
